<compile_context>
chip_gen: v7x
topology: tpu7x:2x2x1
jax: 0.10.0
libtpu: 0.0.40
codegen_flags: <defaults>
</compile_context>

<pallas_src>
import jax
import jax.numpy as jnp
from jax.experimental import pallas as pl
from jax.experimental.pallas import tpu as pltpu


def bahdanau_decoder_kernel(wi_ref, emb_tbl_ref, h_ref, enc_ref,
                            gru_w_ref, out_w_ref, vec_ref, out_ref):
    H = h_ref.shape[1]
    L = enc_ref.shape[0]
    V = out_w_ref.shape[1]
    W = out_ref.shape[1]
    f32 = jnp.float32

    # token embedding gathered in-kernel from the SMEM-prefetched id
    # (dropout = identity, eval mode)
    emb = emb_tbl_ref[pl.ds(wi_ref[0], 1), :]     # (1, H)
    h = h_ref[...]                                # (1, H)  last hidden state
    enc = enc_ref[...]                            # (L, H)  encoder outputs

    u_e = vec_ref[0:1, :H]                        # (1, H)  v_attn folded into W_attn[:, H:]
    b_ih = vec_ref[1:2, :3 * H]                   # (1, 3H)
    b_hh = vec_ref[2:3, :3 * H]                   # (1, 3H)
    b_out = vec_ref[3:4, :V]                      # (1, V)

    # --- attention: softmax_i( v . (W_a [h; enc_i] + b_a) ) == softmax_i( u_e . enc_i )
    #     (h / bias contributions are constant over i and cancel; no tanh in the spec)
    scores = jax.lax.dot_general(u_e, enc, (((1,), (1,)), ((), ())),
                                 preferred_element_type=f32)               # (1, L)
    m = jnp.max(scores, axis=1, keepdims=True)
    e = jnp.exp(scores - m)
    # TODO(synk): pl.reciprocal(approx=True) would move this divide to the EUP;
    #             kept exact to hold the 1e-5 verification against the reference.
    w = e / jnp.sum(e, axis=1, keepdims=True)                              # (1, L)

    # context = attn_weights . encoder_outputs  -> (1, H)
    context = jnp.dot(w, enc, preferred_element_type=f32)

    # --- GRU cell, both input matmuls fused into ONE MXU pass ---
    #     row 0 of LHS = [emb | context | 0_H]   -> gi = x @ W_ih^T
    #     row 1 of LHS = [0_H | 0_H     | h  ]   -> gh = h @ W_hh^T
    zh = jnp.zeros((1, H), f32)
    lhs = jnp.concatenate(
        [jnp.concatenate([emb, context, zh], axis=1),
         jnp.concatenate([zh, zh, h], axis=1)], axis=0)                    # (2, 3H)
    g = jnp.dot(lhs, gru_w_ref[...], preferred_element_type=f32)           # (2, 3H)
    gi = g[0:1, :] + b_ih
    gh = g[1:2, :] + b_hh
    r = jax.nn.sigmoid(gi[:, 0:H] + gh[:, 0:H])
    z = jax.nn.sigmoid(gi[:, H:2 * H] + gh[:, H:2 * H])
    n = jnp.tanh(gi[:, 2 * H:3 * H] + r * gh[:, 2 * H:3 * H])
    h_new = (1.0 - z) * n + z * h                                          # (1, H)

    # --- output = log_softmax(W_out [h_new ; context] + b_out) ---
    hc = jnp.concatenate([h_new, context], axis=1)                         # (1, 2H)
    logits = jnp.dot(hc, out_w_ref[...],
                     preferred_element_type=f32) + b_out                   # (1, V)
    lm = jnp.max(logits, axis=1, keepdims=True)
    sh = logits - lm
    logp = sh - jnp.log(jnp.sum(jnp.exp(sh), axis=1, keepdims=True))

    # --- pack in registers, ONE unmasked full-tile store ---
    def pad_row(x):
        p = W - x.shape[1]
        if p == 0:
            return x
        return jnp.concatenate([x, jnp.zeros((1, p), f32)], axis=1)

    packed = jnp.concatenate(
        [pad_row(logp),                                   # row 0: log-probs
         pad_row(h_new),                                  # row 1: new hidden
         pad_row(w),                                      # row 2: attention weights
         jnp.zeros((out_ref.shape[0] - 3, W), f32)],      # rows 3..7: padding
        axis=0)                                           # (8, W)
    out_ref[...] = packed


def make_params(key, H, V):
    keys = jax.random.split(key, 10)

    def init(k, shape, scale=0.1):
        return (scale * jax.random.normal(k, shape)).astype(jnp.float32)

    return {
        "embedding": init(keys[0], (V, H)),
        "W_attn":    init(keys[1], (H, 2 * H)),   # Attn('concat'): Linear(2H, H)
        "b_attn":    init(keys[2], (H,)),
        "v_attn":    init(keys[3], (1, H)),       # Attn.v
        # TODO(synk): __init__ declares nn.GRU(H, H) but forward feeds a 2H input;
        # the intended 2H-input GRU weights are used here.
        "W_ih":      init(keys[4], (3 * H, 2 * H)),
        "W_hh":      init(keys[5], (3 * H, H)),
        "b_ih":      init(keys[6], (3 * H,)),
        "b_hh":      init(keys[7], (3 * H,)),
        # TODO(synk): __init__ declares nn.Linear(H, V) but forward feeds [output;context] (2H).
        "W_out":     init(keys[8], (V, 2 * H)),
        "b_out":     init(keys[9], (V,)),
    }


def prepare_params(params):
    """One-time weight prep (hoisted out of the per-step jit):
    fold v_attn into W_attn, transpose once, coalesce into a few lane-dense slabs."""
    H = params["W_hh"].shape[1]
    V = params["W_out"].shape[0]

    # u = v @ W_attn ; only the encoder half survives the softmax (the hidden /
    # bias contributions are constant over the sequence and cancel).
    u = params["v_attn"] @ params["W_attn"]                                # (1, 2H)
    u_e = u[0, H:]                                                         # (H,)

    # GRU slab: rows [0:2H) multiply [emb | context], rows [2H:3H) multiply h.
    gru_w = jnp.concatenate([params["W_ih"].T, params["W_hh"].T], axis=0)  # (3H, 3H)
    # Output-projection slab: [h_new | context] @ out_w.
    out_w = params["W_out"].T                                              # (2H, V)

    # Bias/vector slab: rows on sublanes, lane width padded to a multiple of 128.
    width = max(3 * H, V, H)
    width = ((width + 127) // 128) * 128
    vec = jnp.zeros((4, width), jnp.float32)
    vec = vec.at[0, :H].set(u_e)
    vec = vec.at[1, :3 * H].set(params["b_ih"])
    vec = vec.at[2, :3 * H].set(params["b_hh"])
    vec = vec.at[3, :V].set(params["b_out"])

    # TODO(synk): store gru_w / out_w / embedding in bf16 (half DMA/VMEM, MXU-native);
    # kept f32 here to preserve the 1e-5 verification against the reference.
    return {"embedding": params["embedding"], "gru_w": gru_w,
            "out_w": out_w, "vec": vec}


@jax.jit
def bahdanau_decoder_step(prep, word_ids, last_hidden, encoder_outputs):
    """One decode step.
    word_ids: (1,) int32 token id; last_hidden: (1,1,H); encoder_outputs: (L,1,H).
    Returns (log_probs (1,V), hidden (1,1,H), attn_weights (1,1,L))."""
    H = last_hidden.shape[-1]
    L = encoder_outputs.shape[0]
    V = prep["out_w"].shape[1]
    Vocab = prep["embedding"].shape[0]
    vec_w = prep["vec"].shape[1]
    OUT_W = ((max(V, H, L) + 127) // 128) * 128        # lane-dense packed output

    grid_spec = pltpu.PrefetchScalarGridSpec(
        num_scalar_prefetch=1,                         # word_ids -> SMEM
        grid=(1,),
        in_specs=[
            pl.BlockSpec((Vocab, H), lambda i, wi: (0, 0)),        # embedding table
            pl.BlockSpec((None, 1, H), lambda i, wi: (0, 0, 0)),   # last_hidden -> (1,H)
            pl.BlockSpec((L, None, H), lambda i, wi: (0, 0, 0)),   # encoder outs -> (L,H)
            pl.BlockSpec((3 * H, 3 * H), lambda i, wi: (0, 0)),    # GRU weight slab
            pl.BlockSpec((2 * H, V), lambda i, wi: (0, 0)),        # output projection slab
            pl.BlockSpec((4, vec_w), lambda i, wi: (0, 0)),        # biases / folded v
        ],
        out_specs=pl.BlockSpec((8, OUT_W), lambda i, wi: (0, 0)),
    )

    packed = pl.pallas_call(
        bahdanau_decoder_kernel,
        grid_spec=grid_spec,
        out_shape=jax.ShapeDtypeStruct((8, OUT_W), jnp.float32),
        compiler_params=pltpu.CompilerParams(dimension_semantics=("arbitrary",)),
    )(word_ids, prep["embedding"], last_hidden, encoder_outputs,
      prep["gru_w"], prep["out_w"], prep["vec"])

    logp = packed[0:1, :V]                            # (1, V)
    hidden = packed[1:2, :H][None]                    # (1, 1, H)  torch GRU hidden layout
    attn_weights = packed[2:3, :L][None]              # (1, 1, L)  torch (B, 1, L)
    return logp, hidden, attn_weights


def reference_forward(params, word_input, last_hidden, encoder_outputs):
    """Pure-JAX mirror of the (intended) torch forward, for verification."""
    H = last_hidden.shape[-1]
    emb = params["embedding"][word_input][None, :]            # (1, H)
    h = last_hidden[-1]                                       # (1, H)
    enc = encoder_outputs[:, 0, :]                            # (L, H)

    cat_he = jnp.concatenate([jnp.broadcast_to(h, enc.shape), enc], axis=1)  # (L, 2H)
    energy = cat_he @ params["W_attn"].T + params["b_attn"]                  # (L, H)
    scores = (energy * params["v_attn"]).sum(axis=1)                         # (L,)
    w = jax.nn.softmax(scores)                                               # (L,)
    context = (w[:, None] * enc).sum(axis=0, keepdims=True)                  # (1, H)

    x = jnp.concatenate([emb, context], axis=1)                              # (1, 2H)
    gi = x @ params["W_ih"].T + params["b_ih"]
    gh = h @ params["W_hh"].T + params["b_hh"]
    r = jax.nn.sigmoid(gi[:, 0:H] + gh[:, 0:H])
    z = jax.nn.sigmoid(gi[:, H:2 * H] + gh[:, H:2 * H])
    n = jnp.tanh(gi[:, 2 * H:3 * H] + r * gh[:, 2 * H:3 * H])
    h_new = (1.0 - z) * n + z * h

    logits = jnp.concatenate([h_new, context], axis=1) @ params["W_out"].T + params["b_out"]
    logp = jax.nn.log_softmax(logits, axis=1)
    return logp, h_new[None, :, :], w[None, None, :]


if __name__ == "__main__":
    H, V, L = 32, 64, 8
    key = jax.random.PRNGKey(0)
    kp, kh, ke = jax.random.split(key, 3)

    params = make_params(kp, H, V)
    prep = prepare_params(params)           # one-time weight prep (not per step)

    word_ids = jnp.array([5], dtype=jnp.int32)                 # torch-style LongTensor([id])
    last_hidden = (0.1 * jax.random.normal(kh, (1, 1, H))).astype(jnp.float32)
    encoder_outputs = (0.1 * jax.random.normal(ke, (L, 1, H))).astype(jnp.float32)

    logp, hidden, attn_w = bahdanau_decoder_step(prep, word_ids, last_hidden, encoder_outputs)
    jax.block_until_ready((logp, hidden, attn_w))

    ref_logp, ref_hidden, ref_attn = reference_forward(
        params, word_ids[0], last_hidden, encoder_outputs)

    assert logp.shape == (1, V) and hidden.shape == (1, 1, H) and attn_w.shape == (1, 1, L)
    assert jnp.allclose(logp, ref_logp, atol=1e-5), "log-softmax output mismatch"
    assert jnp.allclose(hidden, ref_hidden, atol=1e-5), "GRU hidden mismatch"
    assert jnp.allclose(attn_w, ref_attn, atol=1e-5), "attention weights mismatch"

    print("KERNEL_OK")
</pallas_src>

<mosaic_0001>
module attributes {stable_mosaic.version = 11 : i64} {
  func.func @bahdanau_decoder_kernel(%arg0: i32, %arg1: memref<1xi32, #tpu.memory_space<smem>>, %arg2: memref<64x32xf32, #tpu.memory_space<vmem>>, %arg3: memref<1x1x32xf32, #tpu.memory_space<vmem>>, %arg4: memref<8x1x32xf32, #tpu.memory_space<vmem>>, %arg5: memref<96x96xf32, #tpu.memory_space<vmem>>, %arg6: memref<64x64xf32, #tpu.memory_space<vmem>>, %arg7: memref<4x128xf32, #tpu.memory_space<vmem>>, %arg8: memref<8x128xf32, #tpu.memory_space<vmem>>) attributes {dimension_semantics = [#tpu.dimension_semantics<arbitrary>], iteration_bounds = array<i64: 1>, scalar_prefetch = 1 : i64, scratch_operands = 0 : i64, tpu.core_type = #tpu.core_type<tc>, window_params = [{pipeline_mode = #tpu.pipeline_mode<synchronous>, transform_indices = @transform_0, window_bounds = array<i64: 64, 32>}, {pipeline_mode = #tpu.pipeline_mode<synchronous>, transform_indices = @transform_1, window_bounds = array<i64: 1, 1, 32>}, {pipeline_mode = #tpu.pipeline_mode<synchronous>, transform_indices = @transform_2, window_bounds = array<i64: 8, 1, 32>}, {pipeline_mode = #tpu.pipeline_mode<synchronous>, transform_indices = @transform_3, window_bounds = array<i64: 96, 96>}, {pipeline_mode = #tpu.pipeline_mode<synchronous>, transform_indices = @transform_4, window_bounds = array<i64: 64, 64>}, {pipeline_mode = #tpu.pipeline_mode<synchronous>, transform_indices = @transform_5, window_bounds = array<i64: 4, 128>}, {pipeline_mode = #tpu.pipeline_mode<synchronous>, transform_indices = @transform_6, window_bounds = array<i64: 8, 128>}]} {
    %c0 = arith.constant 0 : index
    %0 = memref.load %arg1[%c0] : memref<1xi32, #tpu.memory_space<smem>>
    %1 = arith.index_cast %0 : i32 to index
    %c0_0 = arith.constant 0 : index
    %2 = vector.load %arg2[%1, %c0_0] : memref<64x32xf32, #tpu.memory_space<vmem>>, vector<1x32xf32>
    %c0_1 = arith.constant 0 : index
    %c0_2 = arith.constant 0 : index
    %c0_3 = arith.constant 0 : index
    %3 = vector.load %arg3[%c0_1, %c0_2, %c0_3] : memref<1x1x32xf32, #tpu.memory_space<vmem>>, vector<1x1x32xf32>
    %4 = vector.shape_cast %3 : vector<1x1x32xf32> to vector<1x32xf32>
    %c0_4 = arith.constant 0 : index
    %c0_5 = arith.constant 0 : index
    %c0_6 = arith.constant 0 : index
    %5 = vector.load %arg4[%c0_4, %c0_5, %c0_6] : memref<8x1x32xf32, #tpu.memory_space<vmem>>, vector<8x1x32xf32>
    %6 = vector.shape_cast %5 : vector<8x1x32xf32> to vector<8x32xf32>
    %c0_7 = arith.constant 0 : index
    %c0_8 = arith.constant 0 : index
    %7 = vector.load %arg7[%c0_7, %c0_8] : memref<4x128xf32, #tpu.memory_space<vmem>>, vector<1x32xf32>
    %c1 = arith.constant 1 : index
    %c0_9 = arith.constant 0 : index
    %8 = vector.load %arg7[%c1, %c0_9] : memref<4x128xf32, #tpu.memory_space<vmem>>, vector<1x96xf32>
    %c2 = arith.constant 2 : index
    %c0_10 = arith.constant 0 : index
    %9 = vector.load %arg7[%c2, %c0_10] : memref<4x128xf32, #tpu.memory_space<vmem>>, vector<1x96xf32>
    %c3 = arith.constant 3 : index
    %c0_11 = arith.constant 0 : index
    %10 = vector.load %arg7[%c3, %c0_11] : memref<4x128xf32, #tpu.memory_space<vmem>>, vector<1x64xf32>
    %cst = arith.constant dense<0.000000e+00> : vector<1x8xf32>
    %11 = tpu.matmul %7, %6, %cst {dimension_numbers = #tpu.dot_dimension_numbers<[1], [1], [0], [0], [0, 0, 1, 0], [], []>} : vector<1x32xf32>, vector<8x32xf32>, vector<1x8xf32> -> vector<1x8xf32>
    %cst_12 = arith.constant dense<0xFF800000> : vector<1xf32>
    %12 = vector.multi_reduction <maximumf>, %11, %cst_12 [1] : vector<1x8xf32> to vector<1xf32>
    %13 = vector.shape_cast %12 : vector<1xf32> to vector<1x1xf32>
    %14 = vector.broadcast %13 : vector<1x1xf32> to vector<1x8xf32>
    %15 = arith.subf %11, %14 : vector<1x8xf32>
    %16 = math.exp %15 : vector<1x8xf32>
    %cst_13 = arith.constant dense<0.000000e+00> : vector<1xf32>
    %17 = vector.multi_reduction <add>, %16, %cst_13 [1] : vector<1x8xf32> to vector<1xf32>
    %18 = vector.shape_cast %17 : vector<1xf32> to vector<1x1xf32>
    %19 = vector.broadcast %18 : vector<1x1xf32> to vector<1x8xf32>
    %20 = arith.divf %16, %19 : vector<1x8xf32>
    %cst_14 = arith.constant dense<0.000000e+00> : vector<1x32xf32>
    %21 = tpu.matmul %20, %6, %cst_14 {dimension_numbers = #tpu.dot_dimension_numbers<[1], [0], [0], [1], [0, 0, 1, 1], [], []>} : vector<1x8xf32>, vector<8x32xf32>, vector<1x32xf32> -> vector<1x32xf32>
    %cst_15 = arith.constant 0.000000e+00 : f32
    %22 = vector.broadcast %cst_15 : f32 to vector<1x32xf32>
    %23 = tpu.concatenate %2, %21, %22 in 1 : vector<1x32xf32>, vector<1x32xf32>, vector<1x32xf32> -> vector<1x96xf32>
    %24 = tpu.concatenate %22, %22, %4 in 1 : vector<1x32xf32>, vector<1x32xf32>, vector<1x32xf32> -> vector<1x96xf32>
    %25 = tpu.concatenate %23, %24 in 0 : vector<1x96xf32>, vector<1x96xf32> -> vector<2x96xf32>
    %c0_16 = arith.constant 0 : index
    %c0_17 = arith.constant 0 : index
    %26 = vector.load %arg5[%c0_16, %c0_17] : memref<96x96xf32, #tpu.memory_space<vmem>>, vector<96x96xf32>
    %cst_18 = arith.constant dense<0.000000e+00> : vector<2x96xf32>
    %27 = tpu.matmul %25, %26, %cst_18 {dimension_numbers = #tpu.dot_dimension_numbers<[1], [0], [0], [1], [0, 0, 1, 1], [], []>} : vector<2x96xf32>, vector<96x96xf32>, vector<2x96xf32> -> vector<2x96xf32>
    %28 = vector.extract_strided_slice %27 {offsets = [0, 0], sizes = [1, 96], strides = [1, 1]} : vector<2x96xf32> to vector<1x96xf32>
    %29 = arith.addf %28, %8 : vector<1x96xf32>
    %30 = vector.extract_strided_slice %27 {offsets = [1, 0], sizes = [1, 96], strides = [1, 1]} : vector<2x96xf32> to vector<1x96xf32>
    %31 = arith.addf %30, %9 : vector<1x96xf32>
    %32 = vector.extract_strided_slice %29 {offsets = [0, 0], sizes = [1, 32], strides = [1, 1]} : vector<1x96xf32> to vector<1x32xf32>
    %33 = vector.extract_strided_slice %31 {offsets = [0, 0], sizes = [1, 32], strides = [1, 1]} : vector<1x96xf32> to vector<1x32xf32>
    %34 = arith.addf %32, %33 : vector<1x32xf32>
    %35 = arith.negf %34 : vector<1x32xf32>
    %36 = math.exp %35 : vector<1x32xf32>
    %cst_19 = arith.constant 1.000000e+00 : f32
    %37 = vector.broadcast %cst_19 : f32 to vector<1x32xf32>
    %38 = arith.addf %37, %36 : vector<1x32xf32>
    %39 = arith.divf %37, %38 : vector<1x32xf32>
    %40 = vector.extract_strided_slice %29 {offsets = [0, 32], sizes = [1, 32], strides = [1, 1]} : vector<1x96xf32> to vector<1x32xf32>
    %41 = vector.extract_strided_slice %31 {offsets = [0, 32], sizes = [1, 32], strides = [1, 1]} : vector<1x96xf32> to vector<1x32xf32>
    %42 = arith.addf %40, %41 : vector<1x32xf32>
    %43 = arith.negf %42 : vector<1x32xf32>
    %44 = math.exp %43 : vector<1x32xf32>
    %cst_20 = arith.constant 1.000000e+00 : f32
    %45 = vector.broadcast %cst_20 : f32 to vector<1x32xf32>
    %46 = arith.addf %45, %44 : vector<1x32xf32>
    %47 = arith.divf %45, %46 : vector<1x32xf32>
    %48 = vector.extract_strided_slice %29 {offsets = [0, 64], sizes = [1, 32], strides = [1, 1]} : vector<1x96xf32> to vector<1x32xf32>
    %49 = vector.extract_strided_slice %31 {offsets = [0, 64], sizes = [1, 32], strides = [1, 1]} : vector<1x96xf32> to vector<1x32xf32>
    %50 = arith.mulf %39, %49 : vector<1x32xf32>
    %51 = arith.addf %48, %50 : vector<1x32xf32>
    %52 = math.tanh %51 : vector<1x32xf32>
    %cst_21 = arith.constant 1.000000e+00 : f32
    %53 = vector.broadcast %cst_21 : f32 to vector<1x32xf32>
    %54 = arith.subf %53, %47 : vector<1x32xf32>
    %55 = arith.mulf %54, %52 : vector<1x32xf32>
    %56 = arith.mulf %47, %4 : vector<1x32xf32>
    %57 = arith.addf %55, %56 : vector<1x32xf32>
    %58 = tpu.concatenate %57, %21 in 1 : vector<1x32xf32>, vector<1x32xf32> -> vector<1x64xf32>
    %c0_22 = arith.constant 0 : index
    %c0_23 = arith.constant 0 : index
    %59 = vector.load %arg6[%c0_22, %c0_23] : memref<64x64xf32, #tpu.memory_space<vmem>>, vector<64x64xf32>
    %cst_24 = arith.constant dense<0.000000e+00> : vector<1x64xf32>
    %60 = tpu.matmul %58, %59, %cst_24 {dimension_numbers = #tpu.dot_dimension_numbers<[1], [0], [0], [1], [0, 0, 1, 1], [], []>} : vector<1x64xf32>, vector<64x64xf32>, vector<1x64xf32> -> vector<1x64xf32>
    %61 = arith.addf %60, %10 : vector<1x64xf32>
    %cst_25 = arith.constant dense<0xFF800000> : vector<1xf32>
    %62 = vector.multi_reduction <maximumf>, %61, %cst_25 [1] : vector<1x64xf32> to vector<1xf32>
    %63 = vector.shape_cast %62 : vector<1xf32> to vector<1x1xf32>
    %64 = vector.broadcast %63 : vector<1x1xf32> to vector<1x64xf32>
    %65 = arith.subf %61, %64 : vector<1x64xf32>
    %66 = math.exp %65 : vector<1x64xf32>
    %cst_26 = arith.constant dense<0.000000e+00> : vector<1xf32>
    %67 = vector.multi_reduction <add>, %66, %cst_26 [1] : vector<1x64xf32> to vector<1xf32>
    %68 = vector.shape_cast %67 : vector<1xf32> to vector<1x1xf32>
    %69 = math.log %68 : vector<1x1xf32>
    %70 = vector.broadcast %69 : vector<1x1xf32> to vector<1x64xf32>
    %71 = arith.subf %65, %70 : vector<1x64xf32>
    %cst_27 = arith.constant 0.000000e+00 : f32
    %72 = vector.broadcast %cst_27 : f32 to vector<1x64xf32>
    %73 = tpu.concatenate %71, %72 in 1 : vector<1x64xf32>, vector<1x64xf32> -> vector<1x128xf32>
    %cst_28 = arith.constant 0.000000e+00 : f32
    %74 = vector.broadcast %cst_28 : f32 to vector<1x96xf32>
    %75 = tpu.concatenate %57, %74 in 1 : vector<1x32xf32>, vector<1x96xf32> -> vector<1x128xf32>
    %cst_29 = arith.constant 0.000000e+00 : f32
    %76 = vector.broadcast %cst_29 : f32 to vector<1x120xf32>
    %77 = tpu.concatenate %20, %76 in 1 : vector<1x8xf32>, vector<1x120xf32> -> vector<1x128xf32>
    %cst_30 = arith.constant 0.000000e+00 : f32
    %78 = vector.broadcast %cst_30 : f32 to vector<5x128xf32>
    %79 = tpu.concatenate %73, %75, %77, %78 in 0 : vector<1x128xf32>, vector<1x128xf32>, vector<1x128xf32>, vector<5x128xf32> -> vector<8x128xf32>
    %c0_31 = arith.constant 0 : index
    %c0_32 = arith.constant 0 : index
    %80 = vector.load %arg8[%c0_31, %c0_32] : memref<8x128xf32, #tpu.memory_space<vmem>>, vector<8x128xf32>
    tpu.vector_store %arg8[%c0_31, %c0_32], %79 {strides = array<i32>} : memref<8x128xf32, #tpu.memory_space<vmem>>, vector<8x128xf32>,
    return
  }
  func.func @transform_0(%arg0: i32, %arg1: memref<1xi32, #tpu.memory_space<smem>>) -> (i32, i32) {
    %c0_i32 = arith.constant 0 : i32
    %c0_i32_0 = arith.constant 0 : i32
    %c0_i32_1 = arith.constant 0 : i32
    return %c0_i32, %c0_i32_0 : i32, i32
  }
  func.func @transform_1(%arg0: i32, %arg1: memref<1xi32, #tpu.memory_space<smem>>) -> (i32, i32, i32) {
    %c0_i32 = arith.constant 0 : i32
    %c0_i32_0 = arith.constant 0 : i32
    %c0_i32_1 = arith.constant 0 : i32
    %c0_i32_2 = arith.constant 0 : i32
    return %c0_i32, %c0_i32_0, %c0_i32_1 : i32, i32, i32
  }
  func.func @transform_2(%arg0: i32, %arg1: memref<1xi32, #tpu.memory_space<smem>>) -> (i32, i32, i32) {
    %c0_i32 = arith.constant 0 : i32
    %c0_i32_0 = arith.constant 0 : i32
    %c0_i32_1 = arith.constant 0 : i32
    %c0_i32_2 = arith.constant 0 : i32
    return %c0_i32, %c0_i32_0, %c0_i32_1 : i32, i32, i32
  }
  func.func @transform_3(%arg0: i32, %arg1: memref<1xi32, #tpu.memory_space<smem>>) -> (i32, i32) {
    %c0_i32 = arith.constant 0 : i32
    %c0_i32_0 = arith.constant 0 : i32
    %c0_i32_1 = arith.constant 0 : i32
    return %c0_i32, %c0_i32_0 : i32, i32
  }
  func.func @transform_4(%arg0: i32, %arg1: memref<1xi32, #tpu.memory_space<smem>>) -> (i32, i32) {
    %c0_i32 = arith.constant 0 : i32
    %c0_i32_0 = arith.constant 0 : i32
    %c0_i32_1 = arith.constant 0 : i32
    return %c0_i32, %c0_i32_0 : i32, i32
  }
  func.func @transform_5(%arg0: i32, %arg1: memref<1xi32, #tpu.memory_space<smem>>) -> (i32, i32) {
    %c0_i32 = arith.constant 0 : i32
    %c0_i32_0 = arith.constant 0 : i32
    %c0_i32_1 = arith.constant 0 : i32
    return %c0_i32, %c0_i32_0 : i32, i32
  }
  func.func @transform_6(%arg0: i32, %arg1: memref<1xi32, #tpu.memory_space<smem>>) -> (i32, i32) {
    %c0_i32 = arith.constant 0 : i32
    %c0_i32_0 = arith.constant 0 : i32
    %c0_i32_1 = arith.constant 0 : i32
    return %c0_i32, %c0_i32_0 : i32, i32
  }
}

</mosaic_0001>

<llo_original>
// kernel: bahdanau_decoder_step.1
$region0: #{bahdanau_decoder_step.1}
  #allocation0 [shape = 'u32[]', space=smem, size = 0x4, offset = 0x4, fixed_abs, tag = 'smem constant byte address 0x4 - core index']
  #allocation1 [shape = 'u32[144,128]{1,0:T(1,128)}', space=vmem, size = 0x12000, scoped, tag = 'internal scratch']
  #allocation2 [shape = 's32[1]{0}', space=sflag, size = 0x4, scoped, tag = 'scoped memory for bahdanau_decoder_step.1']
  #allocation3 [shape = 's32[1]{0:T(128)S(6)}', space=smem, size = 0x200, scoped, tag = 'prefetched SMEM operand 0']
  %s0 = inlined_call_operand.<no memory space> [shape: s32[1], index: 0, kind: input, shape index: {}]
  %s1 = inlined_call_operand.vmem [shape: f32[64,32], index: 1, kind: input, shape index: {}]
  %s2 = inlined_call_operand.vmem [shape: f32[1,1,32], index: 2, kind: input, shape index: {}]
  %s3 = inlined_call_operand.vmem [shape: f32[8,1,32], index: 3, kind: input, shape index: {}]
  %s4 = inlined_call_operand.vmem [shape: f32[96,96], index: 4, kind: input, shape index: {}]
  %s5 = inlined_call_operand.hbm [shape: f32[64,64], index: 5, kind: input, shape index: {}]
  %s6 = inlined_call_operand.vmem [shape: f32[4,128], index: 6, kind: input, shape index: {}]
  %s7 = inlined_call_operand.vmem [shape: f32[8,128], index: 7, kind: output, shape index: {}]
  %s8 = sld [smem:[#allocation0]]
  $region38: #{bahdanau_decoder_step.1} parent=0
    _
  %s10 = ssub.s32 1, %s8
  %s11 = scalar_select 0, %s10, %s8
  %12 = sst [smem:[#allocation3]] %s0
  $region1: #{bahdanau_decoder_step.1} parent=0
    #allocation4 [shape = 'u8[32768]{0}', space=vmem, size = 0x8000, scoped, tag = 'input window, operand 5, single buffered']
    #allocation5 [shape = 's32[1]{0}', space=sflag, size = 0x4, scoped, tag = 'scoped memory for bahdanau_decoder_step.1']
    %13 = vsyncpa [#allocation5], 0
    // Predicated region
    $region2: #{bahdanau_decoder_step.1} parent=1 // pred_check
      _
    $region3: #{bahdanau_decoder_step.1} parent=1 // pred_check_branch
      %15 = sbr.rel (0) target = $region5
    $region4: #{bahdanau_decoder_step.1} parent=1 // pred_region
      _
    $region5: #{bahdanau_decoder_step.1} parent=1 // pred_fallthru
      _
    // Predicated region
    $region6: #{bahdanau_decoder_step.1} parent=1 // pred_check
      _
    $region7: #{bahdanau_decoder_step.1} parent=1 // pred_check_branch
      %17 = sbr.rel (0) target = $region9
    $region8: #{bahdanau_decoder_step.1} parent=1 // pred_region
      _
    $region9: #{bahdanau_decoder_step.1} parent=1 // pred_fallthru
      _
    // Predicated region
    $region10: #{bahdanau_decoder_step.1} parent=1 // pred_check
      _
    $region11: #{bahdanau_decoder_step.1} parent=1 // pred_check_branch
      %19 = sbr.rel (0) target = $region13
    $region12: #{bahdanau_decoder_step.1} parent=1 // pred_region
      _
    $region13: #{bahdanau_decoder_step.1} parent=1 // pred_fallthru
      _
    // Predicated region
    $region14: #{bahdanau_decoder_step.1} parent=1 // pred_check
      _
    $region15: #{bahdanau_decoder_step.1} parent=1 // pred_check_branch
      %21 = sbr.rel (0) target = $region17
    $region16: #{bahdanau_decoder_step.1} parent=1 // pred_region
      _
    $region17: #{bahdanau_decoder_step.1} parent=1 // pred_fallthru
      _
    // Predicated region
    $region18: #{bahdanau_decoder_step.1} parent=1 // pred_check
      _
    $region19: #{bahdanau_decoder_step.1} parent=1 // pred_check_branch
      %23 = sbr.rel (0) target = $region21
    $region20: #{bahdanau_decoder_step.1} parent=1 // pred_region
      %s25 = ssub.s32 1024, 1024
      %26 = vsyncadd [#allocation5], %s25
      %s27 = sshll.u32 [#allocation4], 4
      %s28 = int_to_ptr.vmem [resolvable:$true] %s27
      %33 = dma.hbm_to_vmem [thread:$0]  %s5, 1024, %s28, [#allocation5], 128, 128, 8
    $region21: #{bahdanau_decoder_step.1} parent=1 // pred_fallthru
      _
    // Predicated region
    $region22: #{bahdanau_decoder_step.1} parent=1 // pred_check
      _
    $region23: #{bahdanau_decoder_step.1} parent=1 // pred_check_branch
      %35 = sbr.rel (0) target = $region25
    $region24: #{bahdanau_decoder_step.1} parent=1 // pred_region
      _
    $region25: #{bahdanau_decoder_step.1} parent=1 // pred_fallthru
      _
    // Predicated region
    $region26: #{bahdanau_decoder_step.1} parent=1 // pred_check
      _
    $region27: #{bahdanau_decoder_step.1} parent=1 // pred_check_branch
      %37 = sbr.rel (0) target = $region29
    $region28: #{bahdanau_decoder_step.1} parent=1 // pred_region
      %38 = dma.done [#allocation5], 1024
    $region29: #{bahdanau_decoder_step.1} parent=1 // pred_fallthru
      _
    %s39 = sld [smem:[#allocation3]]
    %s40 = scalar_lea.vmem %s1, %s39
    %v41 = vld [vmem:[%s40] sm:$0x1]
    %v42 = vld [vmem:[%s2] sm:$0x1]
    %v43 = vld [vmem:[%s3] sm:$0x1]
    %v44 = vld [vmem:[%s3 + $0x1] sm:$0x1]
    %v45 = vld [vmem:[%s3 + $0x2] sm:$0x1]
    %v46 = vld [vmem:[%s3 + $0x3] sm:$0x1]
    %v47 = vld [vmem:[%s3 + $0x4] sm:$0x1]
    %v48 = vld [vmem:[%s3 + $0x5] sm:$0x1]
    %v49 = vld [vmem:[%s3 + $0x6] sm:$0x1]
    %v50 = vld [vmem:[%s3 + $0x7] sm:$0x1]
    %v51 = vld [vmem:[%s6] sm:$0x1]
    %v52 = vld [vmem:[%s6 + $0x1] sm:$0x1]
    %v53 = vld [vmem:[%s6 + $0x2] sm:$0x1]
    %v54 = vld [vmem:[%s6 + $0x3] sm:$0x1]
    %v63 = vcombine.low %v43, %v44
    %v64 = vcombine.low %v45, %v46
    %v65 = vcombine.low %v47, %v48
    %v66 = vcombine.low %v49, %v50
    %v68 = vunpack.c.l.s4 1966171168
    %v69 = vunpack.c.0.s8 %v68
    %v70 = vlaneseq
    %v71 = vshrl.u32 %v70, 7
    %v72 = vsub.s32 %v69, %v71
    %v73 = vrot.slane %v63, %v72
    %v75 = vunpack.c.l.s4 1966171168
    %v76 = vunpack.c.0.s8 %v75
    %v77 = vlaneseq
    %v78 = vshrl.u32 %v77, 7
    %v79 = vsub.s32 %v76, %v78
    %v80 = vrot.slane %v64, %v79
    %v82 = vunpack.c.l.s4 1966171168
    %v83 = vunpack.c.0.s8 %v82
    %v84 = vlaneseq
    %v85 = vshrl.u32 %v84, 7
    %v86 = vsub.s32 %v83, %v85
    %v87 = vrot.slane %v65, %v86
    %v89 = vunpack.c.l.s4 1966171168
    %v90 = vunpack.c.0.s8 %v89
    %v91 = vlaneseq
    %v92 = vshrl.u32 %v91, 7
    %v93 = vsub.s32 %v90, %v92
    %v94 = vrot.slane %v66, %v93
    %v95 = vcombine.low %v73, %v80
    %v96 = vcombine.low %v87, %v94
    %v98 = vunpack.c.l.s4 1966171168
    %v99 = vunpack.c.0.s8 %v98
    %v100 = vlaneseq
    %v101 = vshrl.u32 %v100, 7
    %v102 = vsub.s32 %v99, %v101
    %v103 = vrot.slane %v95, %v102
    %v105 = vunpack.c.l.s4 1966171168
    %v106 = vunpack.c.0.s8 %v105
    %v107 = vlaneseq
    %v108 = vshrl.u32 %v107, 7
    %v109 = vsub.s32 %v106, %v108
    %v110 = vrot.slane %v96, %v109
    %v111 = vcombine.low %v103, %v110
    %vm112 = vcmask 261120
    %v114 = vsel %vm112, %v51, 0
    %v116 = vsel %vm112, %v111, 0
    %118 = vmatprep.subr.mxu0 0.0
    %119 = vmatpush1.xpose.msra.mxu0 %v116
    %120 = vmatprep.subr.mxu0 0.0
    %121 = vmatpush1.xpose.msra.mxu0 0.0
    %122 = vmatprep.subr.mxu0 0.0
    %123 = vmatpush1.xpose.msra.mxu0 0.0
    %124 = vmatprep.subr.mxu0 0.0
    %125 = vmatpush1.xpose.msra.mxu0 0.0
    %126 = vmatprep.subr.mxu0 0.0
    %127 = vmatpush1.xpose.msra.mxu0 0.0
    %128 = vmatprep.subr.mxu0 0.0
    %129 = vmatpush1.xpose.msra.mxu0 0.0
    %130 = vmatprep.subr.mxu0 0.0
    %131 = vmatpush1.xpose.msra.mxu0 0.0
    %132 = vmatprep.subr.mxu0 0.0
    %133 = vmatpush1.xpose.msra.mxu0 0.0
    %134 = vmatprep.subr.mxu0 0.0
    %135 = vmatpush1.xpose.msra.mxu0 0.0
    %136 = vmatprep.subr.mxu0 0.0
    %137 = vmatpush1.xpose.msra.mxu0 0.0
    %138 = vmatprep.subr.mxu0 0.0
    %139 = vmatpush1.xpose.msra.mxu0 0.0
    %140 = vmatprep.subr.mxu0 0.0
    %141 = vmatpush1.xpose.msra.mxu0 0.0
    %142 = vmatprep.subr.mxu0 0.0
    %143 = vmatpush1.xpose.msra.mxu0 0.0
    %144 = vmatprep.subr.mxu0 0.0
    %145 = vmatpush1.xpose.msra.mxu0 0.0
    %146 = vmatprep.subr.mxu0 0.0
    %147 = vmatpush1.xpose.msra.mxu0 0.0
    %148 = vmatprep.subr.mxu0 0.0
    %149 = vmatpush1.xpose.msra.mxu0 0.0
    %150 = vmatprep.subr.mxu0 0.0
    %151 = vmatpush1.xpose.msra.mxu0 0.0
    %152 = vmatprep.subr.mxu0 0.0
    %153 = vmatpush1.xpose.msra.mxu0 0.0
    %154 = vmatprep.subr.mxu0 0.0
    %155 = vmatpush1.xpose.msra.mxu0 0.0
    %156 = vmatprep.subr.mxu0 0.0
    %157 = vmatpush1.xpose.msra.mxu0 0.0
    %158 = vmatprep.subr.mxu0 0.0
    %159 = vmatpush1.xpose.msra.mxu0 0.0
    %160 = vmatprep.subr.mxu0 0.0
    %161 = vmatpush1.xpose.msra.mxu0 0.0
    %162 = vmatprep.subr.mxu0 0.0
    %163 = vmatpush1.xpose.msra.mxu0 0.0
    %164 = vmatprep.subr.mxu0 0.0
    %165 = vmatpush1.xpose.msra.mxu0 0.0
    %166 = vmatprep.subr.mxu0 0.0
    %167 = vmatpush1.xpose.msra.mxu0 0.0
    %168 = vmatprep.subr.mxu0 0.0
    %169 = vmatpush1.xpose.msra.mxu0 0.0
    %170 = vmatprep.subr.mxu0 0.0
    %171 = vmatpush1.xpose.msra.mxu0 0.0
    %172 = vmatprep.subr.mxu0 0.0
    %173 = vmatpush1.xpose.msra.mxu0 0.0
    %174 = vmatprep.subr.mxu0 0.0
    %175 = vmatpush1.xpose.msra.mxu0 0.0
    %176 = vmatprep.subr.mxu0 0.0
    %177 = vmatpush1.xpose.msra.mxu0 0.0
    %178 = vmatprep.subr.mxu0 0.0
    %179 = vmatpush1.xpose.msra.mxu0 0.0
    %180 = vmatprep.subr.mxu0 0.0
    %181 = vmatpush1.xpose.msra.mxu0 0.0
    %182 = vmatprep.mubr.f32.mxu0 0.0
    %183 = vmatmul.mubr.f32.gmra.mrb[0].mxu0 %v114
    %v184 = vpop.f32.mrb[0].mxu0
    %v185 = vadd.f32 0.0, %v184
    %v186 = vpop.f32.mrb[0].mxu0
    %187 = vdwg.mxu0
    %vm188 = vcmask 57344
    %v189 = vsel %vm188, %v185, -inf
    %190 = vmax.xlane.f32.xlu0 %v189
    %v191 = vpop.xlane.xlu0 %190
    %v192 = vsub.f32 %v185, %v191
    %v193 = vmul.f32 %v192, 1.442695
    %v194 = vpow.pop %v193
    %v195 = vsel %vm188, %v194, 0.0
    %196 = vadd.xlane.f32.xlu0 %v195
    %v197 = vpop.xlane.xlu0 %196
    %v198 = vrcp.pop %v197
    %v199 = vmul.f32 %v194, %v198
    %vm201 = vcmask 64512
    %v203 = vsel %vm201, %v199, 0
    %205 = vmatprep.subr.mxu0 0.0
    %206 = vmatpush1.msra.mxu0 %v111
    %207 = vmatprep.subr.mxu0 0.0
    %208 = vmatpush1.msra.mxu0 0.0
    %209 = vmatprep.subr.mxu0 0.0
    %210 = vmatpush1.msra.mxu0 0.0
    %211 = vmatprep.subr.mxu0 0.0
    %212 = vmatpush1.msra.mxu0 0.0
    %213 = vmatprep.subr.mxu0 0.0
    %214 = vmatpush1.msra.mxu0 0.0
    %215 = vmatprep.subr.mxu0 0.0
    %216 = vmatpush1.msra.mxu0 0.0
    %217 = vmatprep.subr.mxu0 0.0
    %218 = vmatpush1.msra.mxu0 0.0
    %219 = vmatprep.subr.mxu0 0.0
    %220 = vmatpush1.msra.mxu0 0.0
    %221 = vmatprep.subr.mxu0 0.0
    %222 = vmatpush1.msra.mxu0 0.0
    %223 = vmatprep.subr.mxu0 0.0
    %224 = vmatpush1.msra.mxu0 0.0
    %225 = vmatprep.subr.mxu0 0.0
    %226 = vmatpush1.msra.mxu0 0.0
    %227 = vmatprep.subr.mxu0 0.0
    %228 = vmatpush1.msra.mxu0 0.0
    %229 = vmatprep.subr.mxu0 0.0
    %230 = vmatpush1.msra.mxu0 0.0
    %231 = vmatprep.subr.mxu0 0.0
    %232 = vmatpush1.msra.mxu0 0.0
    %233 = vmatprep.subr.mxu0 0.0
    %234 = vmatpush1.msra.mxu0 0.0
    %235 = vmatprep.subr.mxu0 0.0
    %236 = vmatpush1.msra.mxu0 0.0
    %237 = vmatprep.subr.mxu0 0.0
    %238 = vmatpush1.msra.mxu0 0.0
    %239 = vmatprep.subr.mxu0 0.0
    %240 = vmatpush1.msra.mxu0 0.0
    %241 = vmatprep.subr.mxu0 0.0
    %242 = vmatpush1.msra.mxu0 0.0
    %243 = vmatprep.subr.mxu0 0.0
    %244 = vmatpush1.msra.mxu0 0.0
    %245 = vmatprep.subr.mxu0 0.0
    %246 = vmatpush1.msra.mxu0 0.0
    %247 = vmatprep.subr.mxu0 0.0
    %248 = vmatpush1.msra.mxu0 0.0
    %249 = vmatprep.subr.mxu0 0.0
    %250 = vmatpush1.msra.mxu0 0.0
    %251 = vmatprep.subr.mxu0 0.0
    %252 = vmatpush1.msra.mxu0 0.0
    %253 = vmatprep.subr.mxu0 0.0
    %254 = vmatpush1.msra.mxu0 0.0
    %255 = vmatprep.subr.mxu0 0.0
    %256 = vmatpush1.msra.mxu0 0.0
    %257 = vmatprep.subr.mxu0 0.0
    %258 = vmatpush1.msra.mxu0 0.0
    %259 = vmatprep.subr.mxu0 0.0
    %260 = vmatpush1.msra.mxu0 0.0
    %261 = vmatprep.subr.mxu0 0.0
    %262 = vmatpush1.msra.mxu0 0.0
    %263 = vmatprep.subr.mxu0 0.0
    %264 = vmatpush1.msra.mxu0 0.0
    %265 = vmatprep.subr.mxu0 0.0
    %266 = vmatpush1.msra.mxu0 0.0
    %267 = vmatprep.subr.mxu0 0.0
    %268 = vmatpush1.msra.mxu0 0.0
    %269 = vmatprep.mubr.f32.mxu0 0.0
    %270 = vmatmul.mubr.f32.gmra.mrb[0].mxu0 %v203
    %v271 = vpop.f32.mrb[0].mxu0
    %v272 = vadd.f32 0.0, %v271
    %v273 = vpop.f32.mrb[0].mxu0
    %274 = vdwg.mxu0
    %276 = vrot.lane.b32.xlu0 %v272, 32
    %v277 = vpop.permute.xlu0 %276
    %v279 = vsel %vm112, %v41, %v277
    %vm280 = vcmask 523264
    %v281 = vsel %vm280, %v279, 0.0
    %v283 = vlaneseq
    %v284 = vshrl.u32 %v283, 7
    %v285 = vsub.s32 0, %v284
    %v286 = vrot.slane %v42, %v285
    %287 = vrot.lane.b32.xlu0 %v286, 64
    %v288 = vpop.permute.xlu0 %287
    %v290 = vsel %vm280, 0.0, %v288
    %v292 = vrot.slane %v290, 7
    %vm294 = vcmask 1040384
    %v295 = vsel %vm294, %v281, %v292
    %v296 = vld [vmem:[%s4] sm:$0xff]
    %v297 = vld [vmem:[%s4 + $0x8] sm:$0xff]
    %v298 = vld [vmem:[%s4 + $0x10] sm:$0xff]
    %v299 = vld [vmem:[%s4 + $0x18] sm:$0xff]
    %v300 = vld [vmem:[%s4 + $0x20] sm:$0xff]
    %v301 = vld [vmem:[%s4 + $0x28] sm:$0xff]
    %v302 = vld [vmem:[%s4 + $0x30] sm:$0xff]
    %v303 = vld [vmem:[%s4 + $0x38] sm:$0xff]
    %v304 = vld [vmem:[%s4 + $0x40] sm:$0xff]
    %v305 = vld [vmem:[%s4 + $0x48] sm:$0xff]
    %v306 = vld [vmem:[%s4 + $0x50] sm:$0xff]
    %v307 = vld [vmem:[%s4 + $0x58] sm:$0xff]
    %vm308 = vcmask 785408
    %v310 = vsel %vm308, %v295, 0
    %312 = vmatprep.subr.mxu0 0.0
    %313 = vmatpush1.msra.mxu0 %v296
    %314 = vmatprep.subr.mxu0 0.0
    %315 = vmatpush1.msra.mxu0 %v297
    %316 = vmatprep.subr.mxu0 0.0
    %317 = vmatpush1.msra.mxu0 %v298
    %318 = vmatprep.subr.mxu0 0.0
    %319 = vmatpush1.msra.mxu0 %v299
    %320 = vmatprep.subr.mxu0 0.0
    %321 = vmatpush1.msra.mxu0 %v300
    %322 = vmatprep.subr.mxu0 0.0
    %323 = vmatpush1.msra.mxu0 %v301
    %324 = vmatprep.subr.mxu0 0.0
    %325 = vmatpush1.msra.mxu0 %v302
    %326 = vmatprep.subr.mxu0 0.0
    %327 = vmatpush1.msra.mxu0 %v303
    %328 = vmatprep.subr.mxu0 0.0
    %329 = vmatpush1.msra.mxu0 %v304
    %330 = vmatprep.subr.mxu0 0.0
    %331 = vmatpush1.msra.mxu0 %v305
    %332 = vmatprep.subr.mxu0 0.0
    %333 = vmatpush1.msra.mxu0 %v306
    %334 = vmatprep.subr.mxu0 0.0
    %335 = vmatpush1.msra.mxu0 %v307
    %336 = vmatprep.subr.mxu0 0.0
    %337 = vmatpush1.msra.mxu0 0.0
    %338 = vmatprep.subr.mxu0 0.0
    %339 = vmatpush1.msra.mxu0 0.0
    %340 = vmatprep.subr.mxu0 0.0
    %341 = vmatpush1.msra.mxu0 0.0
    %342 = vmatprep.subr.mxu0 0.0
    %343 = vmatpush1.msra.mxu0 0.0
    %344 = vmatprep.subr.mxu0 0.0
    %345 = vmatpush1.msra.mxu0 0.0
    %346 = vmatprep.subr.mxu0 0.0
    %347 = vmatpush1.msra.mxu0 0.0
    %348 = vmatprep.subr.mxu0 0.0
    %349 = vmatpush1.msra.mxu0 0.0
    %350 = vmatprep.subr.mxu0 0.0
    %351 = vmatpush1.msra.mxu0 0.0
    %352 = vmatprep.subr.mxu0 0.0
    %353 = vmatpush1.msra.mxu0 0.0
    %354 = vmatprep.subr.mxu0 0.0
    %355 = vmatpush1.msra.mxu0 0.0
    %356 = vmatprep.subr.mxu0 0.0
    %357 = vmatpush1.msra.mxu0 0.0
    %358 = vmatprep.subr.mxu0 0.0
    %359 = vmatpush1.msra.mxu0 0.0
    %360 = vmatprep.subr.mxu0 0.0
    %361 = vmatpush1.msra.mxu0 0.0
    %362 = vmatprep.subr.mxu0 0.0
    %363 = vmatpush1.msra.mxu0 0.0
    %364 = vmatprep.subr.mxu0 0.0
    %365 = vmatpush1.msra.mxu0 0.0
    %366 = vmatprep.subr.mxu0 0.0
    %367 = vmatpush1.msra.mxu0 0.0
    %368 = vmatprep.subr.mxu0 0.0
    %369 = vmatpush1.msra.mxu0 0.0
    %370 = vmatprep.subr.mxu0 0.0
    %371 = vmatpush1.msra.mxu0 0.0
    %372 = vmatprep.subr.mxu0 0.0
    %373 = vmatpush1.msra.mxu0 0.0
    %374 = vmatprep.subr.mxu0 0.0
    %375 = vmatpush1.msra.mxu0 0.0
    %376 = vmatprep.mubr.f32.mxu0 0.0
    %377 = vmatmul.mubr.f32.gmra.mrb[0].mxu0 %v310
    %v378 = vpop.f32.mrb[0].mxu0
    %v379 = vadd.f32 0.0, %v378
    %v380 = vpop.f32.mrb[0].mxu0
    %381 = vdwg.mxu0
    %v382 = vadd.f32 %v379, %v52
    %v384 = vrot.slane %v53, 7
    %v386 = vadd.f32 %v379, %v384
    %v388 = vrot.slane %v386, 1
    %v390 = vadd.f32 %v382, %v388
    %v391 = vxor.u32 %v390, 2147483648
    %v392 = vmul.f32 %v391, 1.442695
    %v393 = vpow.pop %v392
    %v394 = vadd.f32 %v393, 1.0
    %v395 = vrcp.pop %v394
    %v396 = vmul.f32 1.0, %v395
    %397 = vrot.lane.b32.xlu0 %v388, 64
    %v398 = vpop.permute.xlu0 %397
    %v400 = vmul.f32 %v396, %v398
    %402 = vrot.lane.b32.xlu0 %v400, 64
    %v403 = vpop.permute.xlu0 %402
    %v405 = vadd.f32 %v382, %v403
    %v406 = vtanh.pop %v405
    %v407 = vsub.f32 1.0, %v396
    %409 = vrot.lane.b32.xlu0 %v406, 96
    %v410 = vpop.permute.xlu0 %409
    %v412 = vmul.f32 %v407, %v410
    %413 = vrot.lane.b32.xlu0 %v286, 32
    %v414 = vpop.permute.xlu0 %413
    %v416 = vmul.f32 %v396, %v414
    %v417 = vadd.f32 %v412, %v416
    %419 = vrot.lane.b32.xlu0 %v417, 96
    %v420 = vpop.permute.xlu0 %419
    %v422 = vsel %vm112, %v420, %v277
    %v423 = vld [vmem:[#allocation4] sm:$0xff]
    %v424 = vld [vmem:[#allocation4 + $0x8] sm:$0xff]
    %v425 = vld [vmem:[#allocation4 + $0x10] sm:$0xff]
    %v426 = vld [vmem:[#allocation4 + $0x18] sm:$0xff]
    %v427 = vld [vmem:[#allocation4 + $0x20] sm:$0xff]
    %v428 = vld [vmem:[#allocation4 + $0x28] sm:$0xff]
    %v429 = vld [vmem:[#allocation4 + $0x30] sm:$0xff]
    %v430 = vld [vmem:[#allocation4 + $0x38] sm:$0xff]
    %v432 = vsel %vm280, %v422, 0
    %434 = vmatprep.subr.mxu0 0.0
    %435 = vmatpush1.msra.mxu0 %v423
    %436 = vmatprep.subr.mxu0 0.0
    %437 = vmatpush1.msra.mxu0 %v424
    %438 = vmatprep.subr.mxu0 0.0
    %439 = vmatpush1.msra.mxu0 %v425
    %440 = vmatprep.subr.mxu0 0.0
    %441 = vmatpush1.msra.mxu0 %v426
    %442 = vmatprep.subr.mxu0 0.0
    %443 = vmatpush1.msra.mxu0 %v427
    %444 = vmatprep.subr.mxu0 0.0
    %445 = vmatpush1.msra.mxu0 %v428
    %446 = vmatprep.subr.mxu0 0.0
    %447 = vmatpush1.msra.mxu0 %v429
    %448 = vmatprep.subr.mxu0 0.0
    %449 = vmatpush1.msra.mxu0 %v430
    %450 = vmatprep.subr.mxu0 0.0
    %451 = vmatpush1.msra.mxu0 0.0
    %452 = vmatprep.subr.mxu0 0.0
    %453 = vmatpush1.msra.mxu0 0.0
    %454 = vmatprep.subr.mxu0 0.0
    %455 = vmatpush1.msra.mxu0 0.0
    %456 = vmatprep.subr.mxu0 0.0
    %457 = vmatpush1.msra.mxu0 0.0
    %458 = vmatprep.subr.mxu0 0.0
    %459 = vmatpush1.msra.mxu0 0.0
    %460 = vmatprep.subr.mxu0 0.0
    %461 = vmatpush1.msra.mxu0 0.0
    %462 = vmatprep.subr.mxu0 0.0
    %463 = vmatpush1.msra.mxu0 0.0
    %464 = vmatprep.subr.mxu0 0.0
    %465 = vmatpush1.msra.mxu0 0.0
    %466 = vmatprep.subr.mxu0 0.0
    %467 = vmatpush1.msra.mxu0 0.0
    %468 = vmatprep.subr.mxu0 0.0
    %469 = vmatpush1.msra.mxu0 0.0
    %470 = vmatprep.subr.mxu0 0.0
    %471 = vmatpush1.msra.mxu0 0.0
    %472 = vmatprep.subr.mxu0 0.0
    %473 = vmatpush1.msra.mxu0 0.0
    %474 = vmatprep.subr.mxu0 0.0
    %475 = vmatpush1.msra.mxu0 0.0
    %476 = vmatprep.subr.mxu0 0.0
    %477 = vmatpush1.msra.mxu0 0.0
    %478 = vmatprep.subr.mxu0 0.0
    %479 = vmatpush1.msra.mxu0 0.0
    %480 = vmatprep.subr.mxu0 0.0
    %481 = vmatpush1.msra.mxu0 0.0
    %482 = vmatprep.subr.mxu0 0.0
    %483 = vmatpush1.msra.mxu0 0.0
    %484 = vmatprep.subr.mxu0 0.0
    %485 = vmatpush1.msra.mxu0 0.0
    %486 = vmatprep.subr.mxu0 0.0
    %487 = vmatpush1.msra.mxu0 0.0
    %488 = vmatprep.subr.mxu0 0.0
    %489 = vmatpush1.msra.mxu0 0.0
    %490 = vmatprep.subr.mxu0 0.0
    %491 = vmatpush1.msra.mxu0 0.0
    %492 = vmatprep.subr.mxu0 0.0
    %493 = vmatpush1.msra.mxu0 0.0
    %494 = vmatprep.subr.mxu0 0.0
    %495 = vmatpush1.msra.mxu0 0.0
    %496 = vmatprep.subr.mxu0 0.0
    %497 = vmatpush1.msra.mxu0 0.0
    %498 = vmatprep.mubr.f32.mxu0 0.0
    %499 = vmatmul.mubr.f32.gmra.mrb[0].mxu0 %v432
    %v500 = vpop.f32.mrb[0].mxu0
    %v501 = vadd.f32 %v54, %v500
    %v502 = vpop.f32.mrb[0].mxu0
    %503 = vdwg.mxu0
    %vm504 = vcmask 516096
    %v505 = vsel %vm504, %v501, -inf
    %506 = vmax.xlane.f32.xlu0 %v505
    %v507 = vpop.xlane.xlu0 %506
    %v508 = vsub.f32 %v501, %v507
    %v509 = vmul.f32 %v508, 1.442695
    %v510 = vpow.pop %v509
    %v511 = vsel %vm504, %v510, 0.0
    %512 = vadd.xlane.f32.xlu0 %v511
    %v513 = vpop.xlane.xlu0 %512
    %v514 = vlog2.pop %v513
    %v515 = vmul.f32 %v514, 0.6931472
    %v516 = vsub.f32 %v508, %v515
    %v517 = vsel %vm280, %v516, 0.0
    %v518 = vsel %vm112, %v420, 0.0
    %v519 = vsel %vm201, %v199, 0.0
    %v521 = vrot.slane %v518, 7
    %v524 = vrot.slane %v519, 6
    %v526 = vsel %vm294, %v517, %v521
    %vm527 = vcmask 1041408
    %v528 = vsel %vm527, %v526, %v524
    %vm529 = vcmask 1042432
    %v530 = vsel %vm529, %v528, 0.0
    %531 = vst [vmem:[%s7] sm:$0xff] %v530
    // Predicated region
    $region30: #{bahdanau_decoder_step.1} parent=1 // pred_check
      _
    $region31: #{bahdanau_decoder_step.1} parent=1 // pred_check_branch
      %533 = sbr.rel (0) target = $region33
    $region32: #{bahdanau_decoder_step.1} parent=1 // pred_region
      _
    $region33: #{bahdanau_decoder_step.1} parent=1 // pred_fallthru
      _
    // Predicated region
    $region34: #{bahdanau_decoder_step.1} parent=1 // pred_check
      _
    $region35: #{bahdanau_decoder_step.1} parent=1 // pred_check_branch
      %535 = sbr.rel (0) target = $region37
    $region36: #{bahdanau_decoder_step.1} parent=1 // pred_region
      _
    $region37: #{bahdanau_decoder_step.1} parent=1 // pred_fallthru
      _
    %536 = vsyncpa [#allocation5], 1

</llo_original>
